<compile_context>
chip_gen: v5e
topology: v5e:2x2
jax: 0.10.0
libtpu: 0.0.40
codegen_flags: <defaults>
</compile_context>

<pallas_src>
import re

import jax
import jax.numpy as jnp
from jax.experimental import pallas as pl
from jax.experimental.pallas import tpu as pltpu

_MIB = 1024 * 1024


def _round_up(x, m):
    return ((x + m - 1) // m) * m


def _tpu_generation():
    try:
        kind = jax.devices()[0].device_kind.lower()
        m = re.search(r"v(\d+)", kind) or re.search(r"(\d+)", kind)
        return int(m.group(1)) if m else 0
    except Exception:
        return 0


def _vmem_capacity_bytes():
    try:
        cap = int(getattr(pltpu.get_tpu_info(), "vmem_capacity_bytes", 0) or 0)
        if cap > 0:
            return cap
    except Exception:
        pass
    gen = _tpu_generation()
    if gen in (5, 6):
        return 128 * _MIB
    return 64 * _MIB  # v7x / unknown: conservative


def _has_megacore():
    # v7x exposes 2 TensorCores to one kernel; v5e/v6e are single-TC.
    return _tpu_generation() >= 7


_ACTIVATIONS = {
    "relu": lambda h: jnp.maximum(h, 0.0),
    "gelu": lambda h: jax.nn.gelu(h, approximate=False),
    "tanh": jnp.tanh,
    "leaky_relu": lambda h: jnp.where(h >= 0, h, 0.01 * h),
    "silu": jax.nn.silu,
}


# --------------------------------------------------------------------------------------
# One-time parameter preparation (do NOT call per forward pass).
# --------------------------------------------------------------------------------------
def prepare_mlp_params(params, *, compute_dtype="auto", lane_multiple=128):
    """params: list of (W, b) in PyTorch nn.Linear layout, W: (out_dim, in_dim), b: (out_dim,).

    compute_dtype: None (keep param dtype), a dtype (e.g. jnp.bfloat16), or "auto"
                   (bf16 operands on v6e/v7x, param dtype otherwise). Accumulation is always f32.
    Weights are transposed once to (in_dim, out_dim); the final layer is zero-padded so its output
    width is a multiple of `lane_multiple` (lane-dense output slab; sliced back in the wrapper).
    """
    if compute_dtype == "auto":
        compute_dtype = jnp.bfloat16 if _tpu_generation() >= 6 else None
    layers = []
    num_layers = len(params)
    out_dim = int(params[-1][0].shape[0])
    for idx, (w, b) in enumerate(params):
        wt = jnp.asarray(w).T                                   # (in_dim, out_dim)
        bb = jnp.asarray(b).reshape(1, -1).astype(jnp.float32)  # (1, out_dim)
        if idx == num_layers - 1:
            n = wt.shape[1]
            n_pad = _round_up(n, lane_multiple)
            if n_pad != n:
                wt = jnp.pad(wt, ((0, 0), (0, n_pad - n)))
                bb = jnp.pad(bb, ((0, 0), (0, n_pad - n)))
        if compute_dtype is not None:
            wt = wt.astype(compute_dtype)
        layers.append((wt, bb))
    return {"layers": layers, "out_dim": out_dim, "in_dim": int(params[0][0].shape[1])}


# --------------------------------------------------------------------------------------
# Kernels
# --------------------------------------------------------------------------------------
def _make_fused_kernel(num_layers, act_fn):
    """Whole MLP chain for one row tile. refs = (x, w0, b0, ..., w{L-1}, b{L-1}, out)."""
    def kernel(*refs):
        x_ref, out_ref = refs[0], refs[-1]
        wb = refs[1:-1]
        h = x_ref[...]
        for i in range(num_layers):
            w = wb[2 * i][...]        # (in_dim_i, out_dim_i), pre-transposed
            b = wb[2 * i + 1][...]    # (1, out_dim_i), f32
            lhs = h if h.dtype == w.dtype else h.astype(w.dtype)
            h = jnp.dot(lhs, w, preferred_element_type=jnp.float32) + b
            if i < num_layers - 1:
                h = act_fn(h)         # Dropout == identity at inference; BatchNorm off by default.
        out_ref[...] = h.astype(out_ref.dtype)
    return kernel


def _make_linear_kernel(act_fn):
    """One Linear(+activation) for an (M, N) tile with the full K dim resident per block."""
    def kernel(x_ref, w_ref, b_ref, o_ref):
        lhs = x_ref[...]
        w = w_ref[...]
        if lhs.dtype != w.dtype:
            lhs = lhs.astype(w.dtype)
        h = jnp.dot(lhs, w, preferred_element_type=jnp.float32) + b_ref[...]
        if act_fn is not None:
            h = act_fn(h)
        o_ref[...] = h.astype(o_ref.dtype)
    return kernel


# --------------------------------------------------------------------------------------
# Forward wrappers
# --------------------------------------------------------------------------------------
def _layered_forward(x2, layers, out_dtype, *, act_fn, budget, vmem_cap):
    """Per-layer (M, N)-tiled fallback used when resident weights don't fit the VMEM budget
    (e.g. very large heads on v7x's 64 MiB VMEM). Weights stream in (K, tn) column slabs."""
    B = x2.shape[0]
    num_layers = len(layers)
    h = x2
    for li, (wt, bb) in enumerate(layers):
        K, N = wt.shape
        is_last = li == num_layers - 1
        layer_act = None if is_last else act_fn
        o_dtype = out_dtype if is_last else wt.dtype
        h_item = jnp.dtype(h.dtype).itemsize
        w_item = jnp.dtype(wt.dtype).itemsize
        o_item = jnp.dtype(o_dtype).itemsize
        row_align = max(8, 32 // h_item)

        def est(tm, tn):
            return (2 * tm * K * h_item + 2 * K * tn * w_item + 2 * tn * 4
                    + 2 * tm * tn * o_item + 2 * tm * tn * 4)

        tn = min(_round_up(N, 128), 512)
        tm = min(_round_up(B, row_align), 512)
        while tn > 128 and est(tm, tn) > budget:
            tn = _round_up(max(128, tn // 2), 128)
        while tm > row_align and est(tm, tn) > budget:
            tm = _round_up(max(row_align, tm // 2), row_align)
        # TODO(synk): if a single (K, 128) weight slab still exceeds the budget, a K-tiled grid axis
        # with a VMEM f32 accumulator (init/finalize via pl.when) would be required.
        vmem_limit = int(min(vmem_cap - 8 * _MIB, max(32 * _MIB, 2 * est(tm, tn))))

        h = pl.pallas_call(
            _make_linear_kernel(layer_act),
            out_shape=jax.ShapeDtypeStruct((B, N), o_dtype),
            grid=(pl.cdiv(B, tm), pl.cdiv(N, tn)),
            in_specs=[pl.BlockSpec((tm, K), lambda i, j: (i, 0)),
                      pl.BlockSpec((K, tn), lambda i, j: (0, j)),
                      pl.BlockSpec((1, tn), lambda i, j: (0, j))],
            out_specs=pl.BlockSpec((tm, tn), lambda i, j: (i, j)),
            compiler_params=pltpu.CompilerParams(
                dimension_semantics=("parallel", "parallel"),
                vmem_limit_bytes=vmem_limit),
        )(h, wt, bb)
    return h


def mlp_projection_head_forward(x, prepared, *, activation="relu", tile_rows=1024,
                                force_layered=False, single_buffer_weights=True):
    """Inference forward of MLPProjectionHead.

    x        : (..., input_dim)
    prepared : output of prepare_mlp_params (cached; not rebuilt per call)
    returns  : (..., output_dim), dtype of x
    """
    layers = prepared["layers"]
    out_dim = prepared["out_dim"]
    act_fn = _ACTIVATIONS[activation]
    num_layers = len(layers)

    lead_shape = x.shape[:-1]
    in_dim = x.shape[-1]
    n_out_pad = layers[-1][0].shape[1]
    out_dtype = x.dtype

    x2 = x.reshape(-1, in_dim)   # no row padding copy; partial last block is masked by Pallas
    B = x2.shape[0]

    x_item = jnp.dtype(x2.dtype).itemsize
    out_item = jnp.dtype(out_dtype).itemsize
    w_item = jnp.dtype(layers[0][0].dtype).itemsize
    row_align = max(8, 32 // x_item)

    vmem_cap = _vmem_capacity_bytes()
    budget = min(vmem_cap - 10 * _MIB, 100 * _MIB)   # ~54 MiB on v7x, ~100 MiB on v5e/v6e

    # Budget assumes DOUBLE-buffered weights, so the Buffered(1) -> default fallback stays honest.
    w_bytes = 2 * sum(wt.size * w_item + bb.size * 4 for wt, bb in layers)
    max_dim = max([in_dim] + [wt.shape[1] for wt, _ in layers])

    def est_fused(t):
        return (2 * t * in_dim * x_item          # double-buffered input tile
                + 2 * t * n_out_pad * out_item   # double-buffered output tile
                + 3 * t * max_dim * 4            # f32 intermediates + headroom
                + w_bytes)                        # resident weights/biases

    fused_fits = (est_fused(row_align) <= budget) and not force_layered

    if fused_fits:
        tile = min(max(tile_rows, row_align), _round_up(B, row_align))
        tile = _round_up(tile, row_align)
        if _has_megacore() and B >= 2 * row_align and pl.cdiv(B, tile) < 2:
            tile = _round_up(pl.cdiv(B, 2), row_align)     # give both v7x TensorCores work
        while tile > row_align and est_fused(tile) > budget:
            tile = _round_up(max(row_align, tile // 2), row_align)
        grid = (pl.cdiv(B, tile),)
        vmem_limit = int(min(vmem_cap - 8 * _MIB, max(32 * _MIB, 2 * est_fused(tile))))
        flat_wb = [a for pair in layers for a in pair]

        def fused_call(single_buffer):
            wmode = {"pipeline_mode": pl.Buffered(1)} if single_buffer else {}
            in_specs = [pl.BlockSpec((tile, in_dim), lambda i: (i, 0))]
            for wt, bb in layers:
                in_specs.append(pl.BlockSpec(wt.shape, lambda i: (0, 0), **wmode))
                in_specs.append(pl.BlockSpec(bb.shape, lambda i: (0, 0), **wmode))
            return pl.pallas_call(
                _make_fused_kernel(num_layers, act_fn),
                out_shape=jax.ShapeDtypeStruct((B, n_out_pad), out_dtype),
                grid=grid,
                in_specs=in_specs,
                out_specs=pl.BlockSpec((tile, n_out_pad), lambda i: (i, 0)),
                compiler_params=pltpu.CompilerParams(
                    dimension_semantics=("parallel",),
                    vmem_limit_bytes=vmem_limit),
            )(x2, *flat_wb)

        if single_buffer_weights:
            try:
                out2 = fused_call(True)
            except Exception:
                # Some Pallas versions reject Buffered(1) on grid-invariant operands. The budget
                # above was already sized for double-buffered weights, so this cannot overrun VMEM;
                # any genuine kernel error will re-raise from the default-pipelined call below.
                out2 = fused_call(False)
        else:
            out2 = fused_call(False)
    else:
        out2 = _layered_forward(x2, layers, out_dtype, act_fn=act_fn,
                                budget=budget, vmem_cap=vmem_cap)

    if n_out_pad != out_dim:
        out2 = out2[:, :out_dim]
    return out2.reshape(*lead_shape, out_dim)


# --------------------------------------------------------------------------------------
# Init + reference + demo
# --------------------------------------------------------------------------------------
def init_mlp_params(key, input_dim, hidden_dims, output_dim, dtype=jnp.float32):
    """PyTorch-Linear-style init: U(-1/sqrt(fan_in), 1/sqrt(fan_in)). W: (out, in), b: (out,)."""
    dims = [input_dim] + list(hidden_dims) + [output_dim]
    params = []
    for fan_in, fan_out in zip(dims[:-1], dims[1:]):
        key, kw, kb = jax.random.split(key, 3)
        bound = 1.0 / (fan_in ** 0.5)
        w = jax.random.uniform(kw, (fan_out, fan_in), dtype, -bound, bound)
        b = jax.random.uniform(kb, (fan_out,), dtype, -bound, bound)
        params.append((w, b))
    return params


def _reference_forward(x2, params, activation="relu"):
    act = _ACTIVATIONS[activation]
    h = x2.astype(jnp.float32)
    for i, (w, b) in enumerate(params):
        h = h @ w.T + b
        if i < len(params) - 1:
            h = act(h)
    return h.astype(x2.dtype)


if __name__ == "__main__":
    # TODO(synk): training-mode Dropout (RNG masking) and use_batch_norm=True are not implemented;
    #             this is the eval-mode forward of the default config (relu, dropout=identity, no BN).
    input_dim, hidden_dims, output_dim = 32, [64, 32], 16
    batch, seq = 2, 8

    key = jax.random.PRNGKey(0)
    key, kx = jax.random.split(key)

    # Snap inputs/weights to bf16-representable values so the MXU's default-precision f32 matmul
    # (bf16 passes) agrees tightly with the jnp reference.
    x = jax.random.normal(kx, (batch, seq, input_dim), jnp.float32)
    x = x.astype(jnp.bfloat16).astype(jnp.float32)
    params = init_mlp_params(key, input_dim, hidden_dims, output_dim)
    params = [(w.astype(jnp.bfloat16).astype(jnp.float32),
               b.astype(jnp.bfloat16).astype(jnp.float32)) for (w, b) in params]

    ref = _reference_forward(x.reshape(-1, input_dim), params).reshape(batch, seq, output_dim)

    # 1) f32-operand fused kernel (resident weights, lane-dense padded output).
    prep_f32 = prepare_mlp_params(params, compute_dtype=None)
    out = jax.block_until_ready(mlp_projection_head_forward(x, prep_f32))
    assert out.shape == (batch, seq, output_dim)
    assert jnp.allclose(out, ref, atol=2e-2, rtol=2e-2), float(jnp.max(jnp.abs(out - ref)))

    # 2) bf16-operand fused kernel (f32 accumulation) — the "auto" choice on v6e/v7x.
    prep_bf16 = prepare_mlp_params(params, compute_dtype=jnp.bfloat16)
    out_bf16 = jax.block_until_ready(mlp_projection_head_forward(x, prep_bf16))
    assert out_bf16.shape == (batch, seq, output_dim)
    assert jnp.allclose(out_bf16, ref, atol=5e-2, rtol=5e-2)

    # 3) Per-layer tiled fallback path (used automatically when resident weights exceed VMEM budget).
    out_layered = jax.block_until_ready(
        mlp_projection_head_forward(x, prep_f32, force_layered=True))
    assert out_layered.shape == (batch, seq, output_dim)
    assert jnp.allclose(out_layered, ref, atol=2e-2, rtol=2e-2)

    print("KERNEL_OK")
</pallas_src>

<mosaic_0001>
module attributes {stable_mosaic.version = 11 : i64} {
  func.func @kernel(%arg0: i32, %arg1: memref<16x32xf32, #tpu.memory_space<vmem>>, %arg2: memref<32x64xf32, #tpu.memory_space<vmem>>, %arg3: memref<1x64xf32, #tpu.memory_space<vmem>>, %arg4: memref<64x32xf32, #tpu.memory_space<vmem>>, %arg5: memref<1x32xf32, #tpu.memory_space<vmem>>, %arg6: memref<32x128xf32, #tpu.memory_space<vmem>>, %arg7: memref<1x128xf32, #tpu.memory_space<vmem>>, %arg8: memref<16x128xf32, #tpu.memory_space<vmem>>) attributes {dimension_semantics = [#tpu.dimension_semantics<parallel>], iteration_bounds = array<i64: 1>, scalar_prefetch = 0 : i64, scratch_operands = 0 : i64, tpu.core_type = #tpu.core_type<tc>, window_params = [{transform_indices = @transform_0, window_bounds = array<i64: 16, 32>}, {pipeline_mode = #tpu.pipeline_mode<synchronous>, transform_indices = @transform_1, window_bounds = array<i64: 32, 64>}, {pipeline_mode = #tpu.pipeline_mode<synchronous>, transform_indices = @transform_2, window_bounds = array<i64: 1, 64>}, {pipeline_mode = #tpu.pipeline_mode<synchronous>, transform_indices = @transform_3, window_bounds = array<i64: 64, 32>}, {pipeline_mode = #tpu.pipeline_mode<synchronous>, transform_indices = @transform_4, window_bounds = array<i64: 1, 32>}, {pipeline_mode = #tpu.pipeline_mode<synchronous>, transform_indices = @transform_5, window_bounds = array<i64: 32, 128>}, {pipeline_mode = #tpu.pipeline_mode<synchronous>, transform_indices = @transform_6, window_bounds = array<i64: 1, 128>}, {transform_indices = @transform_7, window_bounds = array<i64: 16, 128>}]} {
    %c0 = arith.constant 0 : index
    %c0_0 = arith.constant 0 : index
    %0 = vector.load %arg1[%c0, %c0_0] : memref<16x32xf32, #tpu.memory_space<vmem>>, vector<16x32xf32>
    %c0_1 = arith.constant 0 : index
    %c0_2 = arith.constant 0 : index
    %1 = vector.load %arg2[%c0_1, %c0_2] : memref<32x64xf32, #tpu.memory_space<vmem>>, vector<32x64xf32>
    %c0_3 = arith.constant 0 : index
    %c0_4 = arith.constant 0 : index
    %2 = vector.load %arg3[%c0_3, %c0_4] : memref<1x64xf32, #tpu.memory_space<vmem>>, vector<1x64xf32>
    %cst = arith.constant dense<0.000000e+00> : vector<16x64xf32>
    %3 = tpu.matmul %0, %1, %cst {dimension_numbers = #tpu.dot_dimension_numbers<[1], [0], [0], [1], [0, 0, 1, 1], [], []>} : vector<16x32xf32>, vector<32x64xf32>, vector<16x64xf32> -> vector<16x64xf32>
    %4 = vector.broadcast %2 : vector<1x64xf32> to vector<16x64xf32>
    %5 = arith.addf %3, %4 : vector<16x64xf32>
    %cst_5 = arith.constant 0.000000e+00 : f32
    %6 = vector.broadcast %cst_5 : f32 to vector<16x64xf32>
    %7 = arith.maximumf %5, %6 : vector<16x64xf32>
    %c0_6 = arith.constant 0 : index
    %c0_7 = arith.constant 0 : index
    %8 = vector.load %arg4[%c0_6, %c0_7] : memref<64x32xf32, #tpu.memory_space<vmem>>, vector<64x32xf32>
    %c0_8 = arith.constant 0 : index
    %c0_9 = arith.constant 0 : index
    %9 = vector.load %arg5[%c0_8, %c0_9] : memref<1x32xf32, #tpu.memory_space<vmem>>, vector<1x32xf32>
    %cst_10 = arith.constant dense<0.000000e+00> : vector<16x32xf32>
    %10 = tpu.matmul %7, %8, %cst_10 {dimension_numbers = #tpu.dot_dimension_numbers<[1], [0], [0], [1], [0, 0, 1, 1], [], []>} : vector<16x64xf32>, vector<64x32xf32>, vector<16x32xf32> -> vector<16x32xf32>
    %11 = vector.broadcast %9 : vector<1x32xf32> to vector<16x32xf32>
    %12 = arith.addf %10, %11 : vector<16x32xf32>
    %cst_11 = arith.constant 0.000000e+00 : f32
    %13 = vector.broadcast %cst_11 : f32 to vector<16x32xf32>
    %14 = arith.maximumf %12, %13 : vector<16x32xf32>
    %c0_12 = arith.constant 0 : index
    %c0_13 = arith.constant 0 : index
    %15 = vector.load %arg6[%c0_12, %c0_13] : memref<32x128xf32, #tpu.memory_space<vmem>>, vector<32x128xf32>
    %c0_14 = arith.constant 0 : index
    %c0_15 = arith.constant 0 : index
    %16 = vector.load %arg7[%c0_14, %c0_15] : memref<1x128xf32, #tpu.memory_space<vmem>>, vector<1x128xf32>
    %cst_16 = arith.constant dense<0.000000e+00> : vector<16x128xf32>
    %17 = tpu.matmul %14, %15, %cst_16 {dimension_numbers = #tpu.dot_dimension_numbers<[1], [0], [0], [1], [0, 0, 1, 1], [], []>} : vector<16x32xf32>, vector<32x128xf32>, vector<16x128xf32> -> vector<16x128xf32>
    %18 = vector.broadcast %16 : vector<1x128xf32> to vector<16x128xf32>
    %19 = arith.addf %17, %18 : vector<16x128xf32>
    %c0_17 = arith.constant 0 : index
    %c0_18 = arith.constant 0 : index
    %20 = vector.load %arg8[%c0_17, %c0_18] : memref<16x128xf32, #tpu.memory_space<vmem>>, vector<16x128xf32>
    tpu.vector_store %arg8[%c0_17, %c0_18], %19 {strides = array<i32>} : memref<16x128xf32, #tpu.memory_space<vmem>>, vector<16x128xf32>,
    return
  }
  func.func @transform_0(%arg0: i32) -> (i32, i32) {
    %c0_i32 = arith.constant 0 : i32
    %c0_i32_0 = arith.constant 0 : i32
    return %arg0, %c0_i32 : i32, i32
  }
  func.func @transform_1(%arg0: i32) -> (i32, i32) {
    %c0_i32 = arith.constant 0 : i32
    %c0_i32_0 = arith.constant 0 : i32
    %c0_i32_1 = arith.constant 0 : i32
    return %c0_i32, %c0_i32_0 : i32, i32
  }
  func.func @transform_2(%arg0: i32) -> (i32, i32) {
    %c0_i32 = arith.constant 0 : i32
    %c0_i32_0 = arith.constant 0 : i32
    %c0_i32_1 = arith.constant 0 : i32
    return %c0_i32, %c0_i32_0 : i32, i32
  }
  func.func @transform_3(%arg0: i32) -> (i32, i32) {
    %c0_i32 = arith.constant 0 : i32
    %c0_i32_0 = arith.constant 0 : i32
    %c0_i32_1 = arith.constant 0 : i32
    return %c0_i32, %c0_i32_0 : i32, i32
  }
  func.func @transform_4(%arg0: i32) -> (i32, i32) {
    %c0_i32 = arith.constant 0 : i32
    %c0_i32_0 = arith.constant 0 : i32
    %c0_i32_1 = arith.constant 0 : i32
    return %c0_i32, %c0_i32_0 : i32, i32
  }
  func.func @transform_5(%arg0: i32) -> (i32, i32) {
    %c0_i32 = arith.constant 0 : i32
    %c0_i32_0 = arith.constant 0 : i32
    %c0_i32_1 = arith.constant 0 : i32
    return %c0_i32, %c0_i32_0 : i32, i32
  }
  func.func @transform_6(%arg0: i32) -> (i32, i32) {
    %c0_i32 = arith.constant 0 : i32
    %c0_i32_0 = arith.constant 0 : i32
    %c0_i32_1 = arith.constant 0 : i32
    return %c0_i32, %c0_i32_0 : i32, i32
  }
  func.func @transform_7(%arg0: i32) -> (i32, i32) {
    %c0_i32 = arith.constant 0 : i32
    %c0_i32_0 = arith.constant 0 : i32
    return %arg0, %c0_i32 : i32, i32
  }
}

module attributes {stable_mosaic.version = 11 : i64} {
  func.func @kernel(%arg0: i32, %arg1: memref<16x32xf32, #tpu.memory_space<vmem>>, %arg2: memref<32x64xf32, #tpu.memory_space<vmem>>, %arg3: memref<1x64xf32, #tpu.memory_space<vmem>>, %arg4: memref<64x32xf32, #tpu.memory_space<vmem>>, %arg5: memref<1x32xf32, #tpu.memory_space<vmem>>, %arg6: memref<32x128xf32, #tpu.memory_space<vmem>>, %arg7: memref<1x128xf32, #tpu.memory_space<vmem>>, %arg8: memref<16x128xf32, #tpu.memory_space<vmem>>) attributes {dimension_semantics = [#tpu.dimension_semantics<parallel>], iteration_bounds = array<i64: 1>, scalar_prefetch = 0 : i64, scratch_operands = 0 : i64, tpu.core_type = #tpu.core_type<tc>, window_params = [{transform_indices = @transform_0, window_bounds = array<i64: 16, 32>}, {pipeline_mode = #tpu.pipeline_mode<synchronous>, transform_indices = @transform_1, window_bounds = array<i64: 32, 64>}, {pipeline_mode = #tpu.pipeline_mode<synchronous>, transform_indices = @transform_2, window_bounds = array<i64: 1, 64>}, {pipeline_mode = #tpu.pipeline_mode<synchronous>, transform_indices = @transform_3, window_bounds = array<i64: 64, 32>}, {pipeline_mode = #tpu.pipeline_mode<synchronous>, transform_indices = @transform_4, window_bounds = array<i64: 1, 32>}, {pipeline_mode = #tpu.pipeline_mode<synchronous>, transform_indices = @transform_5, window_bounds = array<i64: 32, 128>}, {pipeline_mode = #tpu.pipeline_mode<synchronous>, transform_indices = @transform_6, window_bounds = array<i64: 1, 128>}, {transform_indices = @transform_7, window_bounds = array<i64: 16, 128>}]} {
    %c0 = arith.constant 0 : index
    %c0_0 = arith.constant 0 : index
    %0 = vector.load %arg1[%c0, %c0_0] : memref<16x32xf32, #tpu.memory_space<vmem>>, vector<16x32xf32>
    %c0_1 = arith.constant 0 : index
    %c0_2 = arith.constant 0 : index
    %1 = vector.load %arg2[%c0_1, %c0_2] : memref<32x64xf32, #tpu.memory_space<vmem>>, vector<32x64xf32>
    %c0_3 = arith.constant 0 : index
    %c0_4 = arith.constant 0 : index
    %2 = vector.load %arg3[%c0_3, %c0_4] : memref<1x64xf32, #tpu.memory_space<vmem>>, vector<1x64xf32>
    %cst = arith.constant dense<0.000000e+00> : vector<16x64xf32>
    %3 = tpu.matmul %0, %1, %cst {dimension_numbers = #tpu.dot_dimension_numbers<[1], [0], [0], [1], [0, 0, 1, 1], [], []>} : vector<16x32xf32>, vector<32x64xf32>, vector<16x64xf32> -> vector<16x64xf32>
    %4 = vector.broadcast %2 : vector<1x64xf32> to vector<16x64xf32>
    %5 = arith.addf %3, %4 : vector<16x64xf32>
    %cst_5 = arith.constant 0.000000e+00 : f32
    %6 = vector.broadcast %cst_5 : f32 to vector<16x64xf32>
    %7 = arith.maximumf %5, %6 : vector<16x64xf32>
    %c0_6 = arith.constant 0 : index
    %c0_7 = arith.constant 0 : index
    %8 = vector.load %arg4[%c0_6, %c0_7] : memref<64x32xf32, #tpu.memory_space<vmem>>, vector<64x32xf32>
    %c0_8 = arith.constant 0 : index
    %c0_9 = arith.constant 0 : index
    %9 = vector.load %arg5[%c0_8, %c0_9] : memref<1x32xf32, #tpu.memory_space<vmem>>, vector<1x32xf32>
    %cst_10 = arith.constant dense<0.000000e+00> : vector<16x32xf32>
    %10 = tpu.matmul %7, %8, %cst_10 {dimension_numbers = #tpu.dot_dimension_numbers<[1], [0], [0], [1], [0, 0, 1, 1], [], []>} : vector<16x64xf32>, vector<64x32xf32>, vector<16x32xf32> -> vector<16x32xf32>
    %11 = vector.broadcast %9 : vector<1x32xf32> to vector<16x32xf32>
    %12 = arith.addf %10, %11 : vector<16x32xf32>
    %cst_11 = arith.constant 0.000000e+00 : f32
    %13 = vector.broadcast %cst_11 : f32 to vector<16x32xf32>
    %14 = arith.maximumf %12, %13 : vector<16x32xf32>
    %c0_12 = arith.constant 0 : index
    %c0_13 = arith.constant 0 : index
    %15 = vector.load %arg6[%c0_12, %c0_13] : memref<32x128xf32, #tpu.memory_space<vmem>>, vector<32x128xf32>
    %c0_14 = arith.constant 0 : index
    %c0_15 = arith.constant 0 : index
    %16 = vector.load %arg7[%c0_14, %c0_15] : memref<1x128xf32, #tpu.memory_space<vmem>>, vector<1x128xf32>
    %cst_16 = arith.constant dense<0.000000e+00> : vector<16x128xf32>
    %17 = tpu.matmul %14, %15, %cst_16 {dimension_numbers = #tpu.dot_dimension_numbers<[1], [0], [0], [1], [0, 0, 1, 1], [], []>} : vector<16x32xf32>, vector<32x128xf32>, vector<16x128xf32> -> vector<16x128xf32>
    %18 = vector.broadcast %16 : vector<1x128xf32> to vector<16x128xf32>
    %19 = arith.addf %17, %18 : vector<16x128xf32>
    %c0_17 = arith.constant 0 : index
    %c0_18 = arith.constant 0 : index
    %20 = vector.load %arg8[%c0_17, %c0_18] : memref<16x128xf32, #tpu.memory_space<vmem>>, vector<16x128xf32>
    tpu.vector_store %arg8[%c0_17, %c0_18], %19 {strides = array<i32>} : memref<16x128xf32, #tpu.memory_space<vmem>>, vector<16x128xf32>,
    return
  }
  func.func @transform_0(%arg0: i32) -> (i32, i32) {
    %c0_i32 = arith.constant 0 : i32
    %c0_i32_0 = arith.constant 0 : i32
    return %arg0, %c0_i32 : i32, i32
  }
  func.func @transform_1(%arg0: i32) -> (i32, i32) {
    %c0_i32 = arith.constant 0 : i32
    %c0_i32_0 = arith.constant 0 : i32
    %c0_i32_1 = arith.constant 0 : i32
    return %c0_i32, %c0_i32_0 : i32, i32
  }
  func.func @transform_2(%arg0: i32) -> (i32, i32) {
    %c0_i32 = arith.constant 0 : i32
    %c0_i32_0 = arith.constant 0 : i32
    %c0_i32_1 = arith.constant 0 : i32
    return %c0_i32, %c0_i32_0 : i32, i32
  }
  func.func @transform_3(%arg0: i32) -> (i32, i32) {
    %c0_i32 = arith.constant 0 : i32
    %c0_i32_0 = arith.constant 0 : i32
    %c0_i32_1 = arith.constant 0 : i32
    return %c0_i32, %c0_i32_0 : i32, i32
  }
  func.func @transform_4(%arg0: i32) -> (i32, i32) {
    %c0_i32 = arith.constant 0 : i32
    %c0_i32_0 = arith.constant 0 : i32
    %c0_i32_1 = arith.constant 0 : i32
    return %c0_i32, %c0_i32_0 : i32, i32
  }
  func.func @transform_5(%arg0: i32) -> (i32, i32) {
    %c0_i32 = arith.constant 0 : i32
    %c0_i32_0 = arith.constant 0 : i32
    %c0_i32_1 = arith.constant 0 : i32
    return %c0_i32, %c0_i32_0 : i32, i32
  }
  func.func @transform_6(%arg0: i32) -> (i32, i32) {
    %c0_i32 = arith.constant 0 : i32
    %c0_i32_0 = arith.constant 0 : i32
    %c0_i32_1 = arith.constant 0 : i32
    return %c0_i32, %c0_i32_0 : i32, i32
  }
  func.func @transform_7(%arg0: i32) -> (i32, i32) {
    %c0_i32 = arith.constant 0 : i32
    %c0_i32_0 = arith.constant 0 : i32
    return %arg0, %c0_i32 : i32, i32
  }
}

</mosaic_0001>

<llo_original>
// kernel: tpu_custom_call.1
$region0: #{tpu_custom_call.1}
  #allocation0 [shape = 'u32[]', space=smem, size = 0x4, offset = 0x4, fixed_abs, tag = 'smem constant byte address 0x4 - core index']
  #allocation1 [shape = 'u32[72,128]{1,0:T(1,128)}', space=vmem, size = 0x9000, scoped, tag = 'internal scratch']
  %s0 = inlined_call_operand.vmem [shape: f32[16,32], index: 0, kind: input, shape index: {}]
  %s1 = inlined_call_operand.vmem [shape: f32[32,64], index: 1, kind: input, shape index: {}]
  %s2 = inlined_call_operand.vmem [shape: f32[1,64], index: 2, kind: input, shape index: {}]
  %s3 = inlined_call_operand.vmem [shape: f32[64,32], index: 3, kind: input, shape index: {}]
  %s4 = inlined_call_operand.vmem [shape: f32[1,32], index: 4, kind: input, shape index: {}]
  %s5 = inlined_call_operand.vmem [shape: f32[32,128], index: 5, kind: input, shape index: {}]
  %s6 = inlined_call_operand.vmem [shape: f32[1,128], index: 6, kind: input, shape index: {}]
  %s7 = inlined_call_operand.hbm [shape: f32[16,128], index: 7, kind: output, shape index: {}]
  %s8 = sld [smem:[#allocation0]]
  $region38: #{tpu_custom_call.1} parent=0
    _
  %s10 = ssub.s32 1, %s8
  %s11 = scalar_select 0, %s10, %s8
  $region1: #{tpu_custom_call.1} parent=0
    #allocation2 [shape = 'u8[8192]{0}', space=vmem, size = 0x2000, scoped, tag = 'output window, operand 0, single buffered']
    #allocation3 [shape = 's32[1]{0}', space=sflag, size = 0x4, scoped, tag = 'scoped memory for tpu_custom_call.1']
    %12 = vsyncpa [#allocation3], 0
    // Predicated region
    $region2: #{tpu_custom_call.1} parent=1 // pred_check
      _
    $region3: #{tpu_custom_call.1} parent=1 // pred_check_branch
      %14 = sbr.rel (0) target = $region5
    $region4: #{tpu_custom_call.1} parent=1 // pred_region
      _
    $region5: #{tpu_custom_call.1} parent=1 // pred_fallthru
      _
    // Predicated region
    $region6: #{tpu_custom_call.1} parent=1 // pred_check
      _
    $region7: #{tpu_custom_call.1} parent=1 // pred_check_branch
      %16 = sbr.rel (0) target = $region9
    $region8: #{tpu_custom_call.1} parent=1 // pred_region
      _
    $region9: #{tpu_custom_call.1} parent=1 // pred_fallthru
      _
    // Predicated region
    $region10: #{tpu_custom_call.1} parent=1 // pred_check
      _
    $region11: #{tpu_custom_call.1} parent=1 // pred_check_branch
      %18 = sbr.rel (0) target = $region13
    $region12: #{tpu_custom_call.1} parent=1 // pred_region
      _
    $region13: #{tpu_custom_call.1} parent=1 // pred_fallthru
      _
    // Predicated region
    $region14: #{tpu_custom_call.1} parent=1 // pred_check
      _
    $region15: #{tpu_custom_call.1} parent=1 // pred_check_branch
      %20 = sbr.rel (0) target = $region17
    $region16: #{tpu_custom_call.1} parent=1 // pred_region
      _
    $region17: #{tpu_custom_call.1} parent=1 // pred_fallthru
      _
    // Predicated region
    $region18: #{tpu_custom_call.1} parent=1 // pred_check
      _
    $region19: #{tpu_custom_call.1} parent=1 // pred_check_branch
      %22 = sbr.rel (0) target = $region21
    $region20: #{tpu_custom_call.1} parent=1 // pred_region
      _
    $region21: #{tpu_custom_call.1} parent=1 // pred_fallthru
      _
    // Predicated region
    $region22: #{tpu_custom_call.1} parent=1 // pred_check
      _
    $region23: #{tpu_custom_call.1} parent=1 // pred_check_branch
      %24 = sbr.rel (0) target = $region25
    $region24: #{tpu_custom_call.1} parent=1 // pred_region
      _
    $region25: #{tpu_custom_call.1} parent=1 // pred_fallthru
      _
    // Predicated region
    $region26: #{tpu_custom_call.1} parent=1 // pred_check
      _
    $region27: #{tpu_custom_call.1} parent=1 // pred_check_branch
      %26 = sbr.rel (0) target = $region29
    $region28: #{tpu_custom_call.1} parent=1 // pred_region
      _
    $region29: #{tpu_custom_call.1} parent=1 // pred_fallthru
      _
    %v27 = vld [vmem:[%s0] sm:$0xff]
    %v28 = vld [vmem:[%s0 + $0x8] sm:$0xff]
    %v29 = vld [vmem:[%s1] sm:$0xff]
    %v30 = vld [vmem:[%s1 + $0x8] sm:$0xff]
    %v31 = vld [vmem:[%s1 + $0x10] sm:$0xff]
    %v32 = vld [vmem:[%s1 + $0x18] sm:$0xff]
    %v33 = vld [vmem:[%s2] sm:$0x1]
    %v35 = vperm.slane %v33, 0
    %vm37 = vcmask 261120
    %v39 = vsel %vm37, %v27, 0
    %v42 = vsel %vm37, %v28, 0
    %44 = vmatpush.msra.mxu0 0.0
    %45 = vmatpush.msra.mxu0 0.0
    %46 = vmatpush.msra.mxu0 0.0
    %47 = vmatpush.msra.mxu0 0.0
    %48 = vmatpush.msra.mxu0 0.0
    %49 = vmatpush.msra.mxu0 0.0
    %50 = vmatpush.msra.mxu0 0.0
    %51 = vmatpush.msra.mxu0 0.0
    %52 = vmatpush.msra.mxu0 0.0
    %53 = vmatpush.msra.mxu0 0.0
    %54 = vmatpush.msra.mxu0 0.0
    %55 = vmatpush.msra.mxu0 0.0
    %56 = vmatpush.msra.mxu0 %v32
    %57 = vmatpush.msra.mxu0 %v31
    %58 = vmatpush.msra.mxu0 %v30
    %59 = vmatpush.msra.mxu0 %v29
    %60 = vmatmul.f32.gmra.mxu0 %v39
    %v61 = vpop.f32.mrf.mxu0
    %v62 = vadd.f32 %v35, %v61
    %63 = vmatmul.f32.gmra.mxu0 %v42
    %v64 = vpop.f32.mrf.mxu0
    %v65 = vadd.f32 %v35, %v64
    %66 = vdwg.mxu0
    %v67 = vmax.f32 %v62, 0.0
    %v68 = vmax.f32 %v65, 0.0
    %v69 = vld [vmem:[%s3] sm:$0xff]
    %v70 = vld [vmem:[%s3 + $0x8] sm:$0xff]
    %v71 = vld [vmem:[%s3 + $0x10] sm:$0xff]
    %v72 = vld [vmem:[%s3 + $0x18] sm:$0xff]
    %v73 = vld [vmem:[%s3 + $0x20] sm:$0xff]
    %v74 = vld [vmem:[%s3 + $0x28] sm:$0xff]
    %v75 = vld [vmem:[%s3 + $0x30] sm:$0xff]
    %v76 = vld [vmem:[%s3 + $0x38] sm:$0xff]
    %v77 = vld [vmem:[%s4] sm:$0x1]
    %v79 = vperm.slane %v77, 0
    %vm81 = vcmask 523264
    %v83 = vsel %vm81, %v67, 0
    %v86 = vsel %vm81, %v68, 0
    %88 = vmatpush.msra.mxu0 0.0
    %89 = vmatpush.msra.mxu0 0.0
    %90 = vmatpush.msra.mxu0 0.0
    %91 = vmatpush.msra.mxu0 0.0
    %92 = vmatpush.msra.mxu0 0.0
    %93 = vmatpush.msra.mxu0 0.0
    %94 = vmatpush.msra.mxu0 0.0
    %95 = vmatpush.msra.mxu0 0.0
    %96 = vmatpush.msra.mxu0 %v76
    %97 = vmatpush.msra.mxu0 %v75
    %98 = vmatpush.msra.mxu0 %v74
    %99 = vmatpush.msra.mxu0 %v73
    %100 = vmatpush.msra.mxu0 %v72
    %101 = vmatpush.msra.mxu0 %v71
    %102 = vmatpush.msra.mxu0 %v70
    %103 = vmatpush.msra.mxu0 %v69
    %104 = vmatmul.f32.gmra.mxu0 %v83
    %v105 = vpop.f32.mrf.mxu0
    %v106 = vadd.f32 %v79, %v105
    %107 = vmatmul.f32.gmra.mxu0 %v86
    %v108 = vpop.f32.mrf.mxu0
    %v109 = vadd.f32 %v79, %v108
    %110 = vdwg.mxu0
    %v111 = vmax.f32 %v106, 0.0
    %v112 = vmax.f32 %v109, 0.0
    %v113 = vld [vmem:[%s5] sm:$0xff]
    %v114 = vld [vmem:[%s5 + $0x8] sm:$0xff]
    %v115 = vld [vmem:[%s5 + $0x10] sm:$0xff]
    %v116 = vld [vmem:[%s5 + $0x18] sm:$0xff]
    %v117 = vld [vmem:[%s6] sm:$0x1]
    %v119 = vperm.slane %v117, 0
    %v122 = vsel %vm37, %v111, 0
    %v125 = vsel %vm37, %v112, 0
    %127 = vmatpush.msra.mxu0 0.0
    %128 = vmatpush.msra.mxu0 0.0
    %129 = vmatpush.msra.mxu0 0.0
    %130 = vmatpush.msra.mxu0 0.0
    %131 = vmatpush.msra.mxu0 0.0
    %132 = vmatpush.msra.mxu0 0.0
    %133 = vmatpush.msra.mxu0 0.0
    %134 = vmatpush.msra.mxu0 0.0
    %135 = vmatpush.msra.mxu0 0.0
    %136 = vmatpush.msra.mxu0 0.0
    %137 = vmatpush.msra.mxu0 0.0
    %138 = vmatpush.msra.mxu0 0.0
    %139 = vmatpush.msra.mxu0 %v116
    %140 = vmatpush.msra.mxu0 %v115
    %141 = vmatpush.msra.mxu0 %v114
    %142 = vmatpush.msra.mxu0 %v113
    %143 = vmatmul.f32.gmra.mxu0 %v122
    %v144 = vpop.f32.mrf.mxu0
    %v145 = vadd.f32 %v119, %v144
    %146 = vmatmul.f32.gmra.mxu0 %v125
    %v147 = vpop.f32.mrf.mxu0
    %v148 = vadd.f32 %v119, %v147
    %149 = vdwg.mxu0
    %150 = vst [vmem:[#allocation2] sm:$0xff] %v145
    %151 = vst [vmem:[#allocation2 + $0x8] sm:$0xff] %v148
    // Predicated region
    $region30: #{tpu_custom_call.1} parent=1 // pred_check
      _
    $region31: #{tpu_custom_call.1} parent=1 // pred_check_branch
      %153 = sbr.rel (0) target = $region33
    $region32: #{tpu_custom_call.1} parent=1 // pred_region
      %155 = vsyncadd [#allocation3], 0
      %s156 = sshll.u32 [#allocation2], 4
      %s157 = int_to_ptr.vmem [resolvable:$true] %s156
      %s158 = sshll.u32 %s7, 4
      %s159 = int_to_ptr.hbm [resolvable:$true] %s158
      %164 = dma.vmem_to_hbm [thread:$0]  %s157, 256, %s159, [#allocation3], 128, 128, 8
    $region33: #{tpu_custom_call.1} parent=1 // pred_fallthru
      _
    // Predicated region
    $region34: #{tpu_custom_call.1} parent=1 // pred_check
      _
    $region35: #{tpu_custom_call.1} parent=1 // pred_check_branch
      %166 = sbr.rel (0) target = $region37
    $region36: #{tpu_custom_call.1} parent=1 // pred_region
      %168 = dma.done [#allocation3], 256
    $region37: #{tpu_custom_call.1} parent=1 // pred_fallthru
      _
    %169 = vsyncpa [#allocation3], 1

// kernel: tpu_custom_call.1
$region0: #{tpu_custom_call.1}
  #allocation0 [shape = 'u32[]', space=smem, size = 0x4, offset = 0x4, fixed_abs, tag = 'smem constant byte address 0x4 - core index']
  #allocation1 [shape = 'u32[72,128]{1,0:T(1,128)}', space=vmem, size = 0x9000, scoped, tag = 'internal scratch']
  %s0 = inlined_call_operand.vmem [shape: f32[16,32], index: 0, kind: input, shape index: {}]
  %s1 = inlined_call_operand.vmem [shape: f32[32,64], index: 1, kind: input, shape index: {}]
  %s2 = inlined_call_operand.vmem [shape: f32[1,64], index: 2, kind: input, shape index: {}]
  %s3 = inlined_call_operand.vmem [shape: f32[64,32], index: 3, kind: input, shape index: {}]
  %s4 = inlined_call_operand.vmem [shape: f32[1,32], index: 4, kind: input, shape index: {}]
  %s5 = inlined_call_operand.vmem [shape: f32[32,128], index: 5, kind: input, shape index: {}]
  %s6 = inlined_call_operand.vmem [shape: f32[1,128], index: 6, kind: input, shape index: {}]
  %s7 = inlined_call_operand.hbm [shape: f32[16,128], index: 7, kind: output, shape index: {}]
  %s8 = sld [smem:[#allocation0]]
  $region38: #{tpu_custom_call.1} parent=0
    _
  %s10 = ssub.s32 1, %s8
  %s11 = scalar_select 0, %s10, %s8
  $region1: #{tpu_custom_call.1} parent=0
    #allocation2 [shape = 'u8[8192]{0}', space=vmem, size = 0x2000, scoped, tag = 'output window, operand 0, single buffered']
    #allocation3 [shape = 's32[1]{0}', space=sflag, size = 0x4, scoped, tag = 'scoped memory for tpu_custom_call.1']
    %12 = vsyncpa [#allocation3], 0
    // Predicated region
    $region2: #{tpu_custom_call.1} parent=1 // pred_check
      _
    $region3: #{tpu_custom_call.1} parent=1 // pred_check_branch
      %14 = sbr.rel (0) target = $region5
    $region4: #{tpu_custom_call.1} parent=1 // pred_region
      _
    $region5: #{tpu_custom_call.1} parent=1 // pred_fallthru
      _
    // Predicated region
    $region6: #{tpu_custom_call.1} parent=1 // pred_check
      _
    $region7: #{tpu_custom_call.1} parent=1 // pred_check_branch
      %16 = sbr.rel (0) target = $region9
    $region8: #{tpu_custom_call.1} parent=1 // pred_region
      _
    $region9: #{tpu_custom_call.1} parent=1 // pred_fallthru
      _
    // Predicated region
    $region10: #{tpu_custom_call.1} parent=1 // pred_check
      _
    $region11: #{tpu_custom_call.1} parent=1 // pred_check_branch
      %18 = sbr.rel (0) target = $region13
    $region12: #{tpu_custom_call.1} parent=1 // pred_region
      _
    $region13: #{tpu_custom_call.1} parent=1 // pred_fallthru
      _
    // Predicated region
    $region14: #{tpu_custom_call.1} parent=1 // pred_check
      _
    $region15: #{tpu_custom_call.1} parent=1 // pred_check_branch
      %20 = sbr.rel (0) target = $region17
    $region16: #{tpu_custom_call.1} parent=1 // pred_region
      _
    $region17: #{tpu_custom_call.1} parent=1 // pred_fallthru
      _
    // Predicated region
    $region18: #{tpu_custom_call.1} parent=1 // pred_check
      _
    $region19: #{tpu_custom_call.1} parent=1 // pred_check_branch
      %22 = sbr.rel (0) target = $region21
    $region20: #{tpu_custom_call.1} parent=1 // pred_region
      _
    $region21: #{tpu_custom_call.1} parent=1 // pred_fallthru
      _
    // Predicated region
    $region22: #{tpu_custom_call.1} parent=1 // pred_check
      _
    $region23: #{tpu_custom_call.1} parent=1 // pred_check_branch
      %24 = sbr.rel (0) target = $region25
    $region24: #{tpu_custom_call.1} parent=1 // pred_region
      _
    $region25: #{tpu_custom_call.1} parent=1 // pred_fallthru
      _
    // Predicated region
    $region26: #{tpu_custom_call.1} parent=1 // pred_check
      _
    $region27: #{tpu_custom_call.1} parent=1 // pred_check_branch
      %26 = sbr.rel (0) target = $region29
    $region28: #{tpu_custom_call.1} parent=1 // pred_region
      _
    $region29: #{tpu_custom_call.1} parent=1 // pred_fallthru
      _
    %v27 = vld [vmem:[%s0] sm:$0xff]
    %v28 = vld [vmem:[%s0 + $0x8] sm:$0xff]
    %v29 = vld [vmem:[%s1] sm:$0xff]
    %v30 = vld [vmem:[%s1 + $0x8] sm:$0xff]
    %v31 = vld [vmem:[%s1 + $0x10] sm:$0xff]
    %v32 = vld [vmem:[%s1 + $0x18] sm:$0xff]
    %v33 = vld [vmem:[%s2] sm:$0x1]
    %v35 = vperm.slane %v33, 0
    %vm37 = vcmask 261120
    %v39 = vsel %vm37, %v27, 0
    %v42 = vsel %vm37, %v28, 0
    %44 = vmatpush.msra.mxu0 0.0
    %45 = vmatpush.msra.mxu0 0.0
    %46 = vmatpush.msra.mxu0 0.0
    %47 = vmatpush.msra.mxu0 0.0
    %48 = vmatpush.msra.mxu0 0.0
    %49 = vmatpush.msra.mxu0 0.0
    %50 = vmatpush.msra.mxu0 0.0
    %51 = vmatpush.msra.mxu0 0.0
    %52 = vmatpush.msra.mxu0 0.0
    %53 = vmatpush.msra.mxu0 0.0
    %54 = vmatpush.msra.mxu0 0.0
    %55 = vmatpush.msra.mxu0 0.0
    %56 = vmatpush.msra.mxu0 %v32
    %57 = vmatpush.msra.mxu0 %v31
    %58 = vmatpush.msra.mxu0 %v30
    %59 = vmatpush.msra.mxu0 %v29
    %60 = vmatmul.f32.gmra.mxu0 %v39
    %v61 = vpop.f32.mrf.mxu0
    %v62 = vadd.f32 %v35, %v61
    %63 = vmatmul.f32.gmra.mxu0 %v42
    %v64 = vpop.f32.mrf.mxu0
    %v65 = vadd.f32 %v35, %v64
    %66 = vdwg.mxu0
    %v67 = vmax.f32 %v62, 0.0
    %v68 = vmax.f32 %v65, 0.0
    %v69 = vld [vmem:[%s3] sm:$0xff]
    %v70 = vld [vmem:[%s3 + $0x8] sm:$0xff]
    %v71 = vld [vmem:[%s3 + $0x10] sm:$0xff]
    %v72 = vld [vmem:[%s3 + $0x18] sm:$0xff]
    %v73 = vld [vmem:[%s3 + $0x20] sm:$0xff]
    %v74 = vld [vmem:[%s3 + $0x28] sm:$0xff]
    %v75 = vld [vmem:[%s3 + $0x30] sm:$0xff]
    %v76 = vld [vmem:[%s3 + $0x38] sm:$0xff]
    %v77 = vld [vmem:[%s4] sm:$0x1]
    %v79 = vperm.slane %v77, 0
    %vm81 = vcmask 523264
    %v83 = vsel %vm81, %v67, 0
    %v86 = vsel %vm81, %v68, 0
    %88 = vmatpush.msra.mxu0 0.0
    %89 = vmatpush.msra.mxu0 0.0
    %90 = vmatpush.msra.mxu0 0.0
    %91 = vmatpush.msra.mxu0 0.0
    %92 = vmatpush.msra.mxu0 0.0
    %93 = vmatpush.msra.mxu0 0.0
    %94 = vmatpush.msra.mxu0 0.0
    %95 = vmatpush.msra.mxu0 0.0
    %96 = vmatpush.msra.mxu0 %v76
    %97 = vmatpush.msra.mxu0 %v75
    %98 = vmatpush.msra.mxu0 %v74
    %99 = vmatpush.msra.mxu0 %v73
    %100 = vmatpush.msra.mxu0 %v72
    %101 = vmatpush.msra.mxu0 %v71
    %102 = vmatpush.msra.mxu0 %v70
    %103 = vmatpush.msra.mxu0 %v69
    %104 = vmatmul.f32.gmra.mxu0 %v83
    %v105 = vpop.f32.mrf.mxu0
    %v106 = vadd.f32 %v79, %v105
    %107 = vmatmul.f32.gmra.mxu0 %v86
    %v108 = vpop.f32.mrf.mxu0
    %v109 = vadd.f32 %v79, %v108
    %110 = vdwg.mxu0
    %v111 = vmax.f32 %v106, 0.0
    %v112 = vmax.f32 %v109, 0.0
    %v113 = vld [vmem:[%s5] sm:$0xff]
    %v114 = vld [vmem:[%s5 + $0x8] sm:$0xff]
    %v115 = vld [vmem:[%s5 + $0x10] sm:$0xff]
    %v116 = vld [vmem:[%s5 + $0x18] sm:$0xff]
    %v117 = vld [vmem:[%s6] sm:$0x1]
    %v119 = vperm.slane %v117, 0
    %v122 = vsel %vm37, %v111, 0
    %v125 = vsel %vm37, %v112, 0
    %127 = vmatpush.msra.mxu0 0.0
    %128 = vmatpush.msra.mxu0 0.0
    %129 = vmatpush.msra.mxu0 0.0
    %130 = vmatpush.msra.mxu0 0.0
    %131 = vmatpush.msra.mxu0 0.0
    %132 = vmatpush.msra.mxu0 0.0
    %133 = vmatpush.msra.mxu0 0.0
    %134 = vmatpush.msra.mxu0 0.0
    %135 = vmatpush.msra.mxu0 0.0
    %136 = vmatpush.msra.mxu0 0.0
    %137 = vmatpush.msra.mxu0 0.0
    %138 = vmatpush.msra.mxu0 0.0
    %139 = vmatpush.msra.mxu0 %v116
    %140 = vmatpush.msra.mxu0 %v115
    %141 = vmatpush.msra.mxu0 %v114
    %142 = vmatpush.msra.mxu0 %v113
    %143 = vmatmul.f32.gmra.mxu0 %v122
    %v144 = vpop.f32.mrf.mxu0
    %v145 = vadd.f32 %v119, %v144
    %146 = vmatmul.f32.gmra.mxu0 %v125
    %v147 = vpop.f32.mrf.mxu0
    %v148 = vadd.f32 %v119, %v147
    %149 = vdwg.mxu0
    %150 = vst [vmem:[#allocation2] sm:$0xff] %v145
    %151 = vst [vmem:[#allocation2 + $0x8] sm:$0xff] %v148
    // Predicated region
    $region30: #{tpu_custom_call.1} parent=1 // pred_check
      _
    $region31: #{tpu_custom_call.1} parent=1 // pred_check_branch
      %153 = sbr.rel (0) target = $region33
    $region32: #{tpu_custom_call.1} parent=1 // pred_region
      %155 = vsyncadd [#allocation3], 0
      %s156 = sshll.u32 [#allocation2], 4
      %s157 = int_to_ptr.vmem [resolvable:$true] %s156
      %s158 = sshll.u32 %s7, 4
      %s159 = int_to_ptr.hbm [resolvable:$true] %s158
      %164 = dma.vmem_to_hbm [thread:$0]  %s157, 256, %s159, [#allocation3], 128, 128, 8
    $region33: #{tpu_custom_call.1} parent=1 // pred_fallthru
      _
    // Predicated region
    $region34: #{tpu_custom_call.1} parent=1 // pred_check
      _
    $region35: #{tpu_custom_call.1} parent=1 // pred_check_branch
      %166 = sbr.rel (0) target = $region37
    $region36: #{tpu_custom_call.1} parent=1 // pred_region
      %168 = dma.done [#allocation3], 256
    $region37: #{tpu_custom_call.1} parent=1 // pred_fallthru
      _
    %169 = vsyncpa [#allocation3], 1

</llo_original>
